<compile_context>
chip_gen: v7x
topology: tpu7x:2x2x1
jax: 0.10.0
libtpu: 0.0.40
codegen_flags: <defaults>
</compile_context>

<pallas_src>
import jax
import jax.numpy as jnp
from jax.experimental import pallas as pl
from jax.experimental.pallas import tpu as pltpu

N_VERTS = 778
N_JOINTS = 21
N_LANE = 128            # lane-dense output width (>= N_JOINTS)


def _adaptor_kernel(a_ref, w_ref, out_ref):
    # a_ref:   (bm, 778)   f32   activation rows (B*C, possibly a tile of them)
    # w_ref:   (128, 778)  f32   adaptor weight zero-padded to 128 rows
    # out_ref: (bm, 128)   f32   lane-dense output; cols >= 21 are zeros
    out_ref[...] = jax.lax.dot_general(
        a_ref[...], w_ref[...],
        (((1,), (1,)), ((), ())),          # contract the vertex dim on both
        preferred_element_type=jnp.float32,
    )


def mano_adaptor_forward(inp, weight, j_regressor, *, block_m=256):
    """inp: (B, 778, 3).  Returns ((B, 3, 21) joints, (21, 778) weight diff)."""
    B, V, C = inp.shape
    assert V == N_VERTS

    # forward() first resets the "fixed" rows of the weight to J_regressor.
    # (Batch-independent; done once here in XLA rather than per grid step.
    #  TODO(synk): in a real deployment cache the fixed weight across calls.)
    fix_idxs = jnp.array([0, 4, 8, 12, 16, 20], dtype=jnp.int32)
    weight = weight.astype(jnp.float32).at[fix_idxs].set(
        j_regressor[fix_idxs].astype(jnp.float32))

    # Second module output: weight - J_regressor.  Batch-independent, so it is
    # computed in plain XLA instead of burning kernel DMA on it every call.
    diff = weight - j_regressor.astype(jnp.float32)

    # Lane-dense weight: pad 21 joint rows -> 128 so the kernel output is a
    # full-lane (M, 128) slab (unmasked vst) instead of a masked (M, 21) one.
    w_pad = jnp.zeros((N_LANE, V), jnp.float32).at[:N_JOINTS].set(weight)

    # inp.transpose(2, 1) -> (B, 3, 778); flatten batch*channel into rows.
    a = jnp.transpose(inp, (0, 2, 1)).reshape(B * C, V).astype(jnp.float32)
    M = B * C

    if M <= block_m:
        # Single full-array block: no manual zero-pad needed (block == array
        # shape waives the (8,128) divisibility rule; Mosaic pads internally).
        bm, grid, out_rows = M, (1,), M
        a_in = a
        sem = ("arbitrary",)
    else:
        # Tile M for VMEM scaling (v7x 64 MiB phys / v5e 16 MiB scoped) and so
        # the grid axis can shard across v7x's 2 TensorCores.
        bm = block_m
        out_rows = pl.cdiv(M, bm) * bm
        a_in = a if out_rows == M else (
            jnp.zeros((out_rows, V), jnp.float32).at[:M].set(a))
        grid = (out_rows // bm,)
        sem = ("parallel",)

    out_pad = pl.pallas_call(
        _adaptor_kernel,
        out_shape=jax.ShapeDtypeStruct((out_rows, N_LANE), jnp.float32),
        grid=grid,
        in_specs=[
            pl.BlockSpec((bm, V), lambda i: (i, 0)),        # activation tile
            pl.BlockSpec((N_LANE, V), lambda i: (0, 0)),    # full weight
        ],
        out_specs=pl.BlockSpec((bm, N_LANE), lambda i: (i, 0)),
        compiler_params=pltpu.CompilerParams(dimension_semantics=sem),
    )(a_in, w_pad)

    out = out_pad[:M, :N_JOINTS].reshape(B, C, N_JOINTS)
    return out, diff


def _build_j_regressor():
    """Deterministic synthetic stand-in for mano_layer._buffers['th_J_regressor'].

    Real buffer is a (16, 778) sparse regressor; we synthesize a row-normalized
    random matrix, append the 5 fingertip one-hot rows, and apply the exact
    reordering from the module.
    """
    key = jax.random.PRNGKey(0)
    base = jax.random.uniform(key, (16, N_VERTS), dtype=jnp.float32)
    base = base / base.sum(axis=1, keepdims=True)
    tip = jnp.zeros((5, N_VERTS), jnp.float32)
    tip = (tip.at[0, 745].set(1.0)
              .at[1, 317].set(1.0)
              .at[2, 444].set(1.0)
              .at[3, 556].set(1.0)
              .at[4, 673].set(1.0))
    full = jnp.concatenate([base, tip], axis=0)  # (21, 778)
    reorder = jnp.array(
        [0, 13, 14, 15, 16, 1, 2, 3, 17, 4, 5, 6, 18, 10, 11, 12, 19, 7, 8, 9, 20],
        dtype=jnp.int32)
    return full[reorder]  # (21, 778)


if __name__ == "__main__":
    j_regressor = _build_j_regressor()
    # adaptor.weight.data = J_regressor  (module __init__)
    weight = j_regressor

    # inp: (B, 778, 3) vertex positions
    B = 2
    inp = jax.random.normal(jax.random.PRNGKey(1), (B, N_VERTS, 3), jnp.float32)

    joints, diff = mano_adaptor_forward(inp, weight, j_regressor)
    joints, diff = jax.block_until_ready((joints, diff))

    # reference check against plain JAX
    ref = jnp.einsum("bvc,jv->bcj", inp, weight)
    assert joints.shape == (B, 3, N_JOINTS)
    assert diff.shape == (N_JOINTS, N_VERTS)
    assert jnp.allclose(joints, ref, atol=1e-4, rtol=1e-4)
    assert jnp.allclose(diff, jnp.zeros_like(diff), atol=1e-6)

    print("KERNEL_OK")
</pallas_src>

<mosaic_0001>
module attributes {stable_mosaic.version = 11 : i64} {
  func.func @_adaptor_kernel(%arg0: i32, %arg1: memref<6x778xf32, #tpu.memory_space<vmem>>, %arg2: memref<128x778xf32, #tpu.memory_space<vmem>>, %arg3: memref<6x128xf32, #tpu.memory_space<vmem>>) attributes {dimension_semantics = [#tpu.dimension_semantics<arbitrary>], iteration_bounds = array<i64: 1>, scalar_prefetch = 0 : i64, scratch_operands = 0 : i64, tpu.core_type = #tpu.core_type<tc>, window_params = [{transform_indices = @transform_0, window_bounds = array<i64: 6, 778>}, {pipeline_mode = #tpu.pipeline_mode<synchronous>, transform_indices = @transform_1, window_bounds = array<i64: 128, 778>}, {transform_indices = @transform_2, window_bounds = array<i64: 6, 128>}]} {
    %c0 = arith.constant 0 : index
    %c0_0 = arith.constant 0 : index
    %0 = vector.load %arg1[%c0, %c0_0] : memref<6x778xf32, #tpu.memory_space<vmem>>, vector<6x778xf32>
    %c0_1 = arith.constant 0 : index
    %c0_2 = arith.constant 0 : index
    %1 = vector.load %arg2[%c0_1, %c0_2] : memref<128x778xf32, #tpu.memory_space<vmem>>, vector<128x778xf32>
    %cst = arith.constant dense<0.000000e+00> : vector<6x128xf32>
    %2 = tpu.matmul %0, %1, %cst {dimension_numbers = #tpu.dot_dimension_numbers<[1], [1], [0], [0], [0, 0, 1, 0], [], []>} : vector<6x778xf32>, vector<128x778xf32>, vector<6x128xf32> -> vector<6x128xf32>
    %c0_3 = arith.constant 0 : index
    %c0_4 = arith.constant 0 : index
    %3 = vector.load %arg3[%c0_3, %c0_4] : memref<6x128xf32, #tpu.memory_space<vmem>>, vector<6x128xf32>
    tpu.vector_store %arg3[%c0_3, %c0_4], %2 {strides = array<i32>} : memref<6x128xf32, #tpu.memory_space<vmem>>, vector<6x128xf32>,
    return
  }
  func.func @transform_0(%arg0: i32) -> (i32, i32) {
    %c0_i32 = arith.constant 0 : i32
    %c0_i32_0 = arith.constant 0 : i32
    return %arg0, %c0_i32 : i32, i32
  }
  func.func @transform_1(%arg0: i32) -> (i32, i32) {
    %c0_i32 = arith.constant 0 : i32
    %c0_i32_0 = arith.constant 0 : i32
    %c0_i32_1 = arith.constant 0 : i32
    return %c0_i32, %c0_i32_0 : i32, i32
  }
  func.func @transform_2(%arg0: i32) -> (i32, i32) {
    %c0_i32 = arith.constant 0 : i32
    %c0_i32_0 = arith.constant 0 : i32
    return %arg0, %c0_i32 : i32, i32
  }
}

</mosaic_0001>

<llo_original>
// kernel: tpu_custom_call.1
$region0: #{tpu_custom_call.1}
  #allocation0 [shape = 'u32[]', space=smem, size = 0x4, offset = 0x4, fixed_abs, tag = 'smem constant byte address 0x4 - core index']
  #allocation1 [shape = 'u32[144,128]{1,0:T(1,128)}', space=vmem, size = 0x12000, scoped, tag = 'internal scratch']
  %s0 = inlined_call_operand.vmem [shape: f32[6,778], index: 0, kind: input, shape index: {}]
  %s1 = inlined_call_operand.vmem [shape: f32[128,778], index: 1, kind: input, shape index: {}]
  %s2 = inlined_call_operand.hbm [shape: f32[6,128], index: 2, kind: output, shape index: {}]
  %s3 = sld [smem:[#allocation0]]
  $region18: #{tpu_custom_call.1} parent=0
    _
  %s5 = ssub.s32 1, %s3
  %s6 = scalar_select 0, %s5, %s3
  $region1: #{tpu_custom_call.1} parent=0
    #allocation2 [shape = 'u8[4096]{0}', space=vmem, size = 0x1000, scoped, tag = 'output window, operand 0, single buffered']
    #allocation3 [shape = 's32[1]{0}', space=sflag, size = 0x4, scoped, tag = 'scoped memory for tpu_custom_call.1']
    %7 = vsyncpa [#allocation3], 0
    // Predicated region
    $region2: #{tpu_custom_call.1} parent=1 // pred_check
      _
    $region3: #{tpu_custom_call.1} parent=1 // pred_check_branch
      %9 = sbr.rel (0) target = $region5
    $region4: #{tpu_custom_call.1} parent=1 // pred_region
      _
    $region5: #{tpu_custom_call.1} parent=1 // pred_fallthru
      _
    // Predicated region
    $region6: #{tpu_custom_call.1} parent=1 // pred_check
      _
    $region7: #{tpu_custom_call.1} parent=1 // pred_check_branch
      %11 = sbr.rel (0) target = $region9
    $region8: #{tpu_custom_call.1} parent=1 // pred_region
      _
    $region9: #{tpu_custom_call.1} parent=1 // pred_fallthru
      _
    %v12 = vld [vmem:[%s0] sm:$0x3f]
    %v13 = vld [vmem:[%s0 + $0x8] sm:$0x3f]
    %v14 = vld [vmem:[%s0 + $0x10] sm:$0x3f]
    %v15 = vld [vmem:[%s0 + $0x18] sm:$0x3f]
    %v16 = vld [vmem:[%s0 + $0x20] sm:$0x3f]
    %v17 = vld [vmem:[%s0 + $0x28] sm:$0x3f]
    %v18 = vld [vmem:[%s0 + $0x30] sm:$0x3f]
    %v19 = vld [vmem:[%s1] sm:$0xff]
    %v20 = vld [vmem:[%s1 + $0x8] sm:$0xff]
    %v21 = vld [vmem:[%s1 + $0x10] sm:$0xff]
    %v22 = vld [vmem:[%s1 + $0x18] sm:$0xff]
    %v23 = vld [vmem:[%s1 + $0x20] sm:$0xff]
    %v24 = vld [vmem:[%s1 + $0x28] sm:$0xff]
    %v25 = vld [vmem:[%s1 + $0x30] sm:$0xff]
    %v26 = vld [vmem:[%s1 + $0x38] sm:$0xff]
    %v27 = vld [vmem:[%s1 + $0x40] sm:$0xff]
    %v28 = vld [vmem:[%s1 + $0x48] sm:$0xff]
    %v29 = vld [vmem:[%s1 + $0x50] sm:$0xff]
    %v30 = vld [vmem:[%s1 + $0x58] sm:$0xff]
    %v31 = vld [vmem:[%s1 + $0x60] sm:$0xff]
    %v32 = vld [vmem:[%s1 + $0x68] sm:$0xff]
    %v33 = vld [vmem:[%s1 + $0x70] sm:$0xff]
    %v34 = vld [vmem:[%s1 + $0x78] sm:$0xff]
    %v35 = vld [vmem:[%s1 + $0x80] sm:$0xff]
    %v36 = vld [vmem:[%s1 + $0x88] sm:$0xff]
    %v37 = vld [vmem:[%s1 + $0x90] sm:$0xff]
    %v38 = vld [vmem:[%s1 + $0x98] sm:$0xff]
    %v39 = vld [vmem:[%s1 + $0xa0] sm:$0xff]
    %v40 = vld [vmem:[%s1 + $0xa8] sm:$0xff]
    %v41 = vld [vmem:[%s1 + $0xb0] sm:$0xff]
    %v42 = vld [vmem:[%s1 + $0xb8] sm:$0xff]
    %v43 = vld [vmem:[%s1 + $0xc0] sm:$0xff]
    %v44 = vld [vmem:[%s1 + $0xc8] sm:$0xff]
    %v45 = vld [vmem:[%s1 + $0xd0] sm:$0xff]
    %v46 = vld [vmem:[%s1 + $0xd8] sm:$0xff]
    %v47 = vld [vmem:[%s1 + $0xe0] sm:$0xff]
    %v48 = vld [vmem:[%s1 + $0xe8] sm:$0xff]
    %v49 = vld [vmem:[%s1 + $0xf0] sm:$0xff]
    %v50 = vld [vmem:[%s1 + $0xf8] sm:$0xff]
    %v51 = vld [vmem:[%s1 + $0x100] sm:$0xff]
    %v52 = vld [vmem:[%s1 + $0x108] sm:$0xff]
    %v53 = vld [vmem:[%s1 + $0x110] sm:$0xff]
    %v54 = vld [vmem:[%s1 + $0x118] sm:$0xff]
    %v55 = vld [vmem:[%s1 + $0x120] sm:$0xff]
    %v56 = vld [vmem:[%s1 + $0x128] sm:$0xff]
    %v57 = vld [vmem:[%s1 + $0x130] sm:$0xff]
    %v58 = vld [vmem:[%s1 + $0x138] sm:$0xff]
    %v59 = vld [vmem:[%s1 + $0x140] sm:$0xff]
    %v60 = vld [vmem:[%s1 + $0x148] sm:$0xff]
    %v61 = vld [vmem:[%s1 + $0x150] sm:$0xff]
    %v62 = vld [vmem:[%s1 + $0x158] sm:$0xff]
    %v63 = vld [vmem:[%s1 + $0x160] sm:$0xff]
    %v64 = vld [vmem:[%s1 + $0x168] sm:$0xff]
    %v65 = vld [vmem:[%s1 + $0x170] sm:$0xff]
    %v66 = vld [vmem:[%s1 + $0x178] sm:$0xff]
    %v67 = vld [vmem:[%s1 + $0x180] sm:$0xff]
    %v68 = vld [vmem:[%s1 + $0x188] sm:$0xff]
    %v69 = vld [vmem:[%s1 + $0x190] sm:$0xff]
    %v70 = vld [vmem:[%s1 + $0x198] sm:$0xff]
    %v71 = vld [vmem:[%s1 + $0x1a0] sm:$0xff]
    %v72 = vld [vmem:[%s1 + $0x1a8] sm:$0xff]
    %v73 = vld [vmem:[%s1 + $0x1b0] sm:$0xff]
    %v74 = vld [vmem:[%s1 + $0x1b8] sm:$0xff]
    %v75 = vld [vmem:[%s1 + $0x1c0] sm:$0xff]
    %v76 = vld [vmem:[%s1 + $0x1c8] sm:$0xff]
    %v77 = vld [vmem:[%s1 + $0x1d0] sm:$0xff]
    %v78 = vld [vmem:[%s1 + $0x1d8] sm:$0xff]
    %v79 = vld [vmem:[%s1 + $0x1e0] sm:$0xff]
    %v80 = vld [vmem:[%s1 + $0x1e8] sm:$0xff]
    %v81 = vld [vmem:[%s1 + $0x1f0] sm:$0xff]
    %v82 = vld [vmem:[%s1 + $0x1f8] sm:$0xff]
    %v83 = vld [vmem:[%s1 + $0x200] sm:$0xff]
    %v84 = vld [vmem:[%s1 + $0x208] sm:$0xff]
    %v85 = vld [vmem:[%s1 + $0x210] sm:$0xff]
    %v86 = vld [vmem:[%s1 + $0x218] sm:$0xff]
    %v87 = vld [vmem:[%s1 + $0x220] sm:$0xff]
    %v88 = vld [vmem:[%s1 + $0x228] sm:$0xff]
    %v89 = vld [vmem:[%s1 + $0x230] sm:$0xff]
    %v90 = vld [vmem:[%s1 + $0x238] sm:$0xff]
    %v91 = vld [vmem:[%s1 + $0x240] sm:$0xff]
    %v92 = vld [vmem:[%s1 + $0x248] sm:$0xff]
    %v93 = vld [vmem:[%s1 + $0x250] sm:$0xff]
    %v94 = vld [vmem:[%s1 + $0x258] sm:$0xff]
    %v95 = vld [vmem:[%s1 + $0x260] sm:$0xff]
    %v96 = vld [vmem:[%s1 + $0x268] sm:$0xff]
    %v97 = vld [vmem:[%s1 + $0x270] sm:$0xff]
    %v98 = vld [vmem:[%s1 + $0x278] sm:$0xff]
    %v99 = vld [vmem:[%s1 + $0x280] sm:$0xff]
    %v100 = vld [vmem:[%s1 + $0x288] sm:$0xff]
    %v101 = vld [vmem:[%s1 + $0x290] sm:$0xff]
    %v102 = vld [vmem:[%s1 + $0x298] sm:$0xff]
    %v103 = vld [vmem:[%s1 + $0x2a0] sm:$0xff]
    %v104 = vld [vmem:[%s1 + $0x2a8] sm:$0xff]
    %v105 = vld [vmem:[%s1 + $0x2b0] sm:$0xff]
    %v106 = vld [vmem:[%s1 + $0x2b8] sm:$0xff]
    %v107 = vld [vmem:[%s1 + $0x2c0] sm:$0xff]
    %v108 = vld [vmem:[%s1 + $0x2c8] sm:$0xff]
    %v109 = vld [vmem:[%s1 + $0x2d0] sm:$0xff]
    %v110 = vld [vmem:[%s1 + $0x2d8] sm:$0xff]
    %v111 = vld [vmem:[%s1 + $0x2e0] sm:$0xff]
    %v112 = vld [vmem:[%s1 + $0x2e8] sm:$0xff]
    %v113 = vld [vmem:[%s1 + $0x2f0] sm:$0xff]
    %v114 = vld [vmem:[%s1 + $0x2f8] sm:$0xff]
    %v115 = vld [vmem:[%s1 + $0x300] sm:$0xff]
    %v116 = vld [vmem:[%s1 + $0x308] sm:$0xff]
    %v117 = vld [vmem:[%s1 + $0x310] sm:$0xff]
    %v118 = vld [vmem:[%s1 + $0x318] sm:$0xff]
    %v119 = vld [vmem:[%s1 + $0x320] sm:$0xff]
    %v120 = vld [vmem:[%s1 + $0x328] sm:$0xff]
    %v121 = vld [vmem:[%s1 + $0x330] sm:$0xff]
    %v122 = vld [vmem:[%s1 + $0x338] sm:$0xff]
    %v123 = vld [vmem:[%s1 + $0x340] sm:$0xff]
    %v124 = vld [vmem:[%s1 + $0x348] sm:$0xff]
    %v125 = vld [vmem:[%s1 + $0x350] sm:$0xff]
    %v126 = vld [vmem:[%s1 + $0x358] sm:$0xff]
    %v127 = vld [vmem:[%s1 + $0x360] sm:$0xff]
    %v128 = vld [vmem:[%s1 + $0x368] sm:$0xff]
    %v129 = vld [vmem:[%s1 + $0x370] sm:$0xff]
    %v130 = vld [vmem:[%s1 + $0x378] sm:$0xff]
    %vm131 = vcmask 80896
    %v133 = vsel %vm131, %v18, 0
    %v136 = vsel %vm131, %v25, 0
    %v139 = vsel %vm131, %v32, 0
    %v142 = vsel %vm131, %v39, 0
    %v145 = vsel %vm131, %v46, 0
    %v148 = vsel %vm131, %v53, 0
    %v151 = vsel %vm131, %v60, 0
    %v154 = vsel %vm131, %v67, 0
    %v157 = vsel %vm131, %v74, 0
    %v160 = vsel %vm131, %v81, 0
    %v163 = vsel %vm131, %v88, 0
    %v166 = vsel %vm131, %v95, 0
    %v169 = vsel %vm131, %v102, 0
    %v172 = vsel %vm131, %v109, 0
    %v175 = vsel %vm131, %v116, 0
    %v178 = vsel %vm131, %v123, 0
    %v181 = vsel %vm131, %v130, 0
    %183 = vmatprep.subr.mxu0 %v20
    %184 = vmatpush1.xpose.msra.mxu0 %v19
    %185 = vmatprep.subr.mxu0 %v27
    %186 = vmatpush1.xpose.msra.mxu0 %v26
    %187 = vmatprep.subr.mxu0 %v34
    %188 = vmatpush1.xpose.msra.mxu0 %v33
    %189 = vmatprep.subr.mxu0 %v41
    %190 = vmatpush1.xpose.msra.mxu0 %v40
    %191 = vmatprep.subr.mxu0 %v48
    %192 = vmatpush1.xpose.msra.mxu0 %v47
    %193 = vmatprep.subr.mxu0 %v55
    %194 = vmatpush1.xpose.msra.mxu0 %v54
    %195 = vmatprep.subr.mxu0 %v62
    %196 = vmatpush1.xpose.msra.mxu0 %v61
    %197 = vmatprep.subr.mxu0 %v69
    %198 = vmatpush1.xpose.msra.mxu0 %v68
    %199 = vmatprep.subr.mxu0 %v76
    %200 = vmatpush1.xpose.msra.mxu0 %v75
    %201 = vmatprep.subr.mxu0 %v83
    %202 = vmatpush1.xpose.msra.mxu0 %v82
    %203 = vmatprep.subr.mxu0 %v90
    %204 = vmatpush1.xpose.msra.mxu0 %v89
    %205 = vmatprep.subr.mxu0 %v97
    %206 = vmatpush1.xpose.msra.mxu0 %v96
    %207 = vmatprep.subr.mxu0 %v104
    %208 = vmatpush1.xpose.msra.mxu0 %v103
    %209 = vmatprep.subr.mxu0 %v111
    %210 = vmatpush1.xpose.msra.mxu0 %v110
    %211 = vmatprep.subr.mxu0 %v118
    %212 = vmatpush1.xpose.msra.mxu0 %v117
    %213 = vmatprep.subr.mxu0 %v125
    %214 = vmatpush1.xpose.msra.mxu0 %v124
    %215 = vmatprep.subr.mxu0 0.0
    %216 = vmatpush1.xpose.msra.mxu0 0.0
    %217 = vmatprep.subr.mxu0 0.0
    %218 = vmatpush1.xpose.msra.mxu0 0.0
    %219 = vmatprep.subr.mxu0 0.0
    %220 = vmatpush1.xpose.msra.mxu0 0.0
    %221 = vmatprep.subr.mxu0 0.0
    %222 = vmatpush1.xpose.msra.mxu0 0.0
    %223 = vmatprep.subr.mxu0 0.0
    %224 = vmatpush1.xpose.msra.mxu0 0.0
    %225 = vmatprep.subr.mxu0 0.0
    %226 = vmatpush1.xpose.msra.mxu0 0.0
    %227 = vmatprep.subr.mxu0 0.0
    %228 = vmatpush1.xpose.msra.mxu0 0.0
    %229 = vmatprep.subr.mxu0 0.0
    %230 = vmatpush1.xpose.msra.mxu0 0.0
    %231 = vmatprep.subr.mxu0 0.0
    %232 = vmatpush1.xpose.msra.mxu0 0.0
    %233 = vmatprep.subr.mxu0 0.0
    %234 = vmatpush1.xpose.msra.mxu0 0.0
    %235 = vmatprep.subr.mxu0 0.0
    %236 = vmatpush1.xpose.msra.mxu0 0.0
    %237 = vmatprep.subr.mxu0 0.0
    %238 = vmatpush1.xpose.msra.mxu0 0.0
    %239 = vmatprep.subr.mxu0 0.0
    %240 = vmatpush1.xpose.msra.mxu0 0.0
    %241 = vmatprep.subr.mxu0 0.0
    %242 = vmatpush1.xpose.msra.mxu0 0.0
    %243 = vmatprep.subr.mxu0 0.0
    %244 = vmatpush1.xpose.msra.mxu0 0.0
    %245 = vmatprep.subr.mxu0 0.0
    %246 = vmatpush1.xpose.msra.mxu0 0.0
    %247 = vmatprep.mubr.f32.mxu0 %v13
    %248 = vmatmul.mubr.f32.gmra.mrb[0].mxu0 %v12
    %v249 = vpop.f32.mrb[0].mxu0
    %v250 = vadd.f32 0.0, %v249
    %v251 = vpop.f32.mrb[0].mxu0
    %252 = vdwg.mxu0
    %253 = vmatprep.subr.mxu0 %v22
    %254 = vmatpush1.xpose.msra.mxu0 %v21
    %255 = vmatprep.subr.mxu0 %v29
    %256 = vmatpush1.xpose.msra.mxu0 %v28
    %257 = vmatprep.subr.mxu0 %v36
    %258 = vmatpush1.xpose.msra.mxu0 %v35
    %259 = vmatprep.subr.mxu0 %v43
    %260 = vmatpush1.xpose.msra.mxu0 %v42
    %261 = vmatprep.subr.mxu0 %v50
    %262 = vmatpush1.xpose.msra.mxu0 %v49
    %263 = vmatprep.subr.mxu0 %v57
    %264 = vmatpush1.xpose.msra.mxu0 %v56
    %265 = vmatprep.subr.mxu0 %v64
    %266 = vmatpush1.xpose.msra.mxu0 %v63
    %267 = vmatprep.subr.mxu0 %v71
    %268 = vmatpush1.xpose.msra.mxu0 %v70
    %269 = vmatprep.subr.mxu0 %v78
    %270 = vmatpush1.xpose.msra.mxu0 %v77
    %271 = vmatprep.subr.mxu0 %v85
    %272 = vmatpush1.xpose.msra.mxu0 %v84
    %273 = vmatprep.subr.mxu0 %v92
    %274 = vmatpush1.xpose.msra.mxu0 %v91
    %275 = vmatprep.subr.mxu0 %v99
    %276 = vmatpush1.xpose.msra.mxu0 %v98
    %277 = vmatprep.subr.mxu0 %v106
    %278 = vmatpush1.xpose.msra.mxu0 %v105
    %279 = vmatprep.subr.mxu0 %v113
    %280 = vmatpush1.xpose.msra.mxu0 %v112
    %281 = vmatprep.subr.mxu0 %v120
    %282 = vmatpush1.xpose.msra.mxu0 %v119
    %283 = vmatprep.subr.mxu0 %v127
    %284 = vmatpush1.xpose.msra.mxu0 %v126
    %285 = vmatprep.subr.mxu0 0.0
    %286 = vmatpush1.xpose.msra.mxu0 0.0
    %287 = vmatprep.subr.mxu0 0.0
    %288 = vmatpush1.xpose.msra.mxu0 0.0
    %289 = vmatprep.subr.mxu0 0.0
    %290 = vmatpush1.xpose.msra.mxu0 0.0
    %291 = vmatprep.subr.mxu0 0.0
    %292 = vmatpush1.xpose.msra.mxu0 0.0
    %293 = vmatprep.subr.mxu0 0.0
    %294 = vmatpush1.xpose.msra.mxu0 0.0
    %295 = vmatprep.subr.mxu0 0.0
    %296 = vmatpush1.xpose.msra.mxu0 0.0
    %297 = vmatprep.subr.mxu0 0.0
    %298 = vmatpush1.xpose.msra.mxu0 0.0
    %299 = vmatprep.subr.mxu0 0.0
    %300 = vmatpush1.xpose.msra.mxu0 0.0
    %301 = vmatprep.subr.mxu0 0.0
    %302 = vmatpush1.xpose.msra.mxu0 0.0
    %303 = vmatprep.subr.mxu0 0.0
    %304 = vmatpush1.xpose.msra.mxu0 0.0
    %305 = vmatprep.subr.mxu0 0.0
    %306 = vmatpush1.xpose.msra.mxu0 0.0
    %307 = vmatprep.subr.mxu0 0.0
    %308 = vmatpush1.xpose.msra.mxu0 0.0
    %309 = vmatprep.subr.mxu0 0.0
    %310 = vmatpush1.xpose.msra.mxu0 0.0
    %311 = vmatprep.subr.mxu0 0.0
    %312 = vmatpush1.xpose.msra.mxu0 0.0
    %313 = vmatprep.subr.mxu0 0.0
    %314 = vmatpush1.xpose.msra.mxu0 0.0
    %315 = vmatprep.subr.mxu0 0.0
    %316 = vmatpush1.xpose.msra.mxu0 0.0
    %317 = vmatprep.mubr.f32.mxu0 %v15
    %318 = vmatmul.mubr.f32.gmra.mrb[0].mxu0 %v14
    %v319 = vpop.f32.mrb[0].mxu0
    %v320 = vadd.f32 %v250, %v319
    %v321 = vpop.f32.mrb[0].mxu0
    %322 = vdwg.mxu0
    %323 = vmatprep.subr.mxu0 %v24
    %324 = vmatpush1.xpose.msra.mxu0 %v23
    %325 = vmatprep.subr.mxu0 %v31
    %326 = vmatpush1.xpose.msra.mxu0 %v30
    %327 = vmatprep.subr.mxu0 %v38
    %328 = vmatpush1.xpose.msra.mxu0 %v37
    %329 = vmatprep.subr.mxu0 %v45
    %330 = vmatpush1.xpose.msra.mxu0 %v44
    %331 = vmatprep.subr.mxu0 %v52
    %332 = vmatpush1.xpose.msra.mxu0 %v51
    %333 = vmatprep.subr.mxu0 %v59
    %334 = vmatpush1.xpose.msra.mxu0 %v58
    %335 = vmatprep.subr.mxu0 %v66
    %336 = vmatpush1.xpose.msra.mxu0 %v65
    %337 = vmatprep.subr.mxu0 %v73
    %338 = vmatpush1.xpose.msra.mxu0 %v72
    %339 = vmatprep.subr.mxu0 %v80
    %340 = vmatpush1.xpose.msra.mxu0 %v79
    %341 = vmatprep.subr.mxu0 %v87
    %342 = vmatpush1.xpose.msra.mxu0 %v86
    %343 = vmatprep.subr.mxu0 %v94
    %344 = vmatpush1.xpose.msra.mxu0 %v93
    %345 = vmatprep.subr.mxu0 %v101
    %346 = vmatpush1.xpose.msra.mxu0 %v100
    %347 = vmatprep.subr.mxu0 %v108
    %348 = vmatpush1.xpose.msra.mxu0 %v107
    %349 = vmatprep.subr.mxu0 %v115
    %350 = vmatpush1.xpose.msra.mxu0 %v114
    %351 = vmatprep.subr.mxu0 %v122
    %352 = vmatpush1.xpose.msra.mxu0 %v121
    %353 = vmatprep.subr.mxu0 %v129
    %354 = vmatpush1.xpose.msra.mxu0 %v128
    %355 = vmatprep.subr.mxu0 0.0
    %356 = vmatpush1.xpose.msra.mxu0 0.0
    %357 = vmatprep.subr.mxu0 0.0
    %358 = vmatpush1.xpose.msra.mxu0 0.0
    %359 = vmatprep.subr.mxu0 0.0
    %360 = vmatpush1.xpose.msra.mxu0 0.0
    %361 = vmatprep.subr.mxu0 0.0
    %362 = vmatpush1.xpose.msra.mxu0 0.0
    %363 = vmatprep.subr.mxu0 0.0
    %364 = vmatpush1.xpose.msra.mxu0 0.0
    %365 = vmatprep.subr.mxu0 0.0
    %366 = vmatpush1.xpose.msra.mxu0 0.0
    %367 = vmatprep.subr.mxu0 0.0
    %368 = vmatpush1.xpose.msra.mxu0 0.0
    %369 = vmatprep.subr.mxu0 0.0
    %370 = vmatpush1.xpose.msra.mxu0 0.0
    %371 = vmatprep.subr.mxu0 0.0
    %372 = vmatpush1.xpose.msra.mxu0 0.0
    %373 = vmatprep.subr.mxu0 0.0
    %374 = vmatpush1.xpose.msra.mxu0 0.0
    %375 = vmatprep.subr.mxu0 0.0
    %376 = vmatpush1.xpose.msra.mxu0 0.0
    %377 = vmatprep.subr.mxu0 0.0
    %378 = vmatpush1.xpose.msra.mxu0 0.0
    %379 = vmatprep.subr.mxu0 0.0
    %380 = vmatpush1.xpose.msra.mxu0 0.0
    %381 = vmatprep.subr.mxu0 0.0
    %382 = vmatpush1.xpose.msra.mxu0 0.0
    %383 = vmatprep.subr.mxu0 0.0
    %384 = vmatpush1.xpose.msra.mxu0 0.0
    %385 = vmatprep.subr.mxu0 0.0
    %386 = vmatpush1.xpose.msra.mxu0 0.0
    %387 = vmatprep.mubr.f32.mxu0 %v17
    %388 = vmatmul.mubr.f32.gmra.mrb[0].mxu0 %v16
    %v389 = vpop.f32.mrb[0].mxu0
    %v390 = vadd.f32 %v320, %v389
    %v391 = vpop.f32.mrb[0].mxu0
    %392 = vdwg.mxu0
    %393 = vmatprep.subr.mxu0 0.0
    %394 = vmatpush1.xpose.msra.mxu0 %v136
    %395 = vmatprep.subr.mxu0 0.0
    %396 = vmatpush1.xpose.msra.mxu0 %v139
    %397 = vmatprep.subr.mxu0 0.0
    %398 = vmatpush1.xpose.msra.mxu0 %v142
    %399 = vmatprep.subr.mxu0 0.0
    %400 = vmatpush1.xpose.msra.mxu0 %v145
    %401 = vmatprep.subr.mxu0 0.0
    %402 = vmatpush1.xpose.msra.mxu0 %v148
    %403 = vmatprep.subr.mxu0 0.0
    %404 = vmatpush1.xpose.msra.mxu0 %v151
    %405 = vmatprep.subr.mxu0 0.0
    %406 = vmatpush1.xpose.msra.mxu0 %v154
    %407 = vmatprep.subr.mxu0 0.0
    %408 = vmatpush1.xpose.msra.mxu0 %v157
    %409 = vmatprep.subr.mxu0 0.0
    %410 = vmatpush1.xpose.msra.mxu0 %v160
    %411 = vmatprep.subr.mxu0 0.0
    %412 = vmatpush1.xpose.msra.mxu0 %v163
    %413 = vmatprep.subr.mxu0 0.0
    %414 = vmatpush1.xpose.msra.mxu0 %v166
    %415 = vmatprep.subr.mxu0 0.0
    %416 = vmatpush1.xpose.msra.mxu0 %v169
    %417 = vmatprep.subr.mxu0 0.0
    %418 = vmatpush1.xpose.msra.mxu0 %v172
    %419 = vmatprep.subr.mxu0 0.0
    %420 = vmatpush1.xpose.msra.mxu0 %v175
    %421 = vmatprep.subr.mxu0 0.0
    %422 = vmatpush1.xpose.msra.mxu0 %v178
    %423 = vmatprep.subr.mxu0 0.0
    %424 = vmatpush1.xpose.msra.mxu0 %v181
    %425 = vmatprep.subr.mxu0 0.0
    %426 = vmatpush1.xpose.msra.mxu0 0.0
    %427 = vmatprep.subr.mxu0 0.0
    %428 = vmatpush1.xpose.msra.mxu0 0.0
    %429 = vmatprep.subr.mxu0 0.0
    %430 = vmatpush1.xpose.msra.mxu0 0.0
    %431 = vmatprep.subr.mxu0 0.0
    %432 = vmatpush1.xpose.msra.mxu0 0.0
    %433 = vmatprep.subr.mxu0 0.0
    %434 = vmatpush1.xpose.msra.mxu0 0.0
    %435 = vmatprep.subr.mxu0 0.0
    %436 = vmatpush1.xpose.msra.mxu0 0.0
    %437 = vmatprep.subr.mxu0 0.0
    %438 = vmatpush1.xpose.msra.mxu0 0.0
    %439 = vmatprep.subr.mxu0 0.0
    %440 = vmatpush1.xpose.msra.mxu0 0.0
    %441 = vmatprep.subr.mxu0 0.0
    %442 = vmatpush1.xpose.msra.mxu0 0.0
    %443 = vmatprep.subr.mxu0 0.0
    %444 = vmatpush1.xpose.msra.mxu0 0.0
    %445 = vmatprep.subr.mxu0 0.0
    %446 = vmatpush1.xpose.msra.mxu0 0.0
    %447 = vmatprep.subr.mxu0 0.0
    %448 = vmatpush1.xpose.msra.mxu0 0.0
    %449 = vmatprep.subr.mxu0 0.0
    %450 = vmatpush1.xpose.msra.mxu0 0.0
    %451 = vmatprep.subr.mxu0 0.0
    %452 = vmatpush1.xpose.msra.mxu0 0.0
    %453 = vmatprep.subr.mxu0 0.0
    %454 = vmatpush1.xpose.msra.mxu0 0.0
    %455 = vmatprep.subr.mxu0 0.0
    %456 = vmatpush1.xpose.msra.mxu0 0.0
    %457 = vmatprep.mubr.f32.mxu0 0.0
    %458 = vmatmul.mubr.f32.gmra.mrb[0].mxu0 %v133
    %v459 = vpop.f32.mrb[0].mxu0
    %v460 = vadd.f32 %v390, %v459
    %v461 = vpop.f32.mrb[0].mxu0
    %462 = vdwg.mxu0
    %463 = vst [vmem:[#allocation2] sm:$0x3f] %v460
    // Predicated region
    $region10: #{tpu_custom_call.1} parent=1 // pred_check
      _
    $region11: #{tpu_custom_call.1} parent=1 // pred_check_branch
      %465 = sbr.rel (0) target = $region13
    $region12: #{tpu_custom_call.1} parent=1 // pred_region
      %s467 = ssub.s32 128, 128
      %468 = vsyncadd [#allocation3], %s467
      %s470 = sshll.u32 [#allocation2], 4
      %s471 = int_to_ptr.vmem [resolvable:$true] %s470
      %473 = dma.vmem_to_hbm [thread:$0]  %s471, 128, %s2, [#allocation3]
    $region13: #{tpu_custom_call.1} parent=1 // pred_fallthru
      _
    // Predicated region
    $region14: #{tpu_custom_call.1} parent=1 // pred_check
      _
    $region15: #{tpu_custom_call.1} parent=1 // pred_check_branch
      %475 = sbr.rel (0) target = $region17
    $region16: #{tpu_custom_call.1} parent=1 // pred_region
      %476 = dma.done [#allocation3], 128
    $region17: #{tpu_custom_call.1} parent=1 // pred_fallthru
      _
    %477 = vsyncpa [#allocation3], 1

</llo_original>
